<compile_context>
chip_gen: v5e
topology: v5e:2x2
jax: 0.10.0
libtpu: 0.0.40
codegen_flags: <defaults>
</compile_context>

<pallas_src>
import jax
import jax.numpy as jnp
from jax.experimental import pallas as pl
from jax.experimental.pallas import tpu as pltpu

NUM_FLOWS = 3  # number of flows in the sequence

_TARGET_BLOCK_BYTES = 4 * 1024 * 1024   # ~4 MiB per x block (2-4 MiB sweet spot)
_MAX_FULL_ROW_LANES = 4096              # prefer tile_l = HW (contiguous DMA) up to this
_TILE_L_FALLBACK = 2048                 # lane tile (multiple of 128) when HW is huge


def _round_down(v, m):
    return max(m, (v // m) * m)


def _round_up(v, m):
    return ((v + m - 1) // m) * m


def flow_affine_kernel(p_ref, x_ref, z_ref):
    # p_ref: (tile_r, 2) fused per-row params; col 0 = scale, col 1 = shift.
    # x_ref / z_ref: (tile_r, tile_l).  One FMA per element; HBM-bound.
    p = p_ref[...]
    s = p[:, 0:1]                        # (tile_r, 1) lane-broadcasts
    b = p[:, 1:2]
    x = x_ref[...].astype(jnp.float32)
    z_ref[...] = (x * s + b).astype(z_ref.dtype)


def flow_sequence_forward(x, log_scale, shift, *, donate_x=False):
    """x: (B, C, H, W) NCHW.  log_scale, shift: (NUM_FLOWS, C)."""
    B, C, H, W = x.shape
    HW = H * W
    R = B * C
    itemsize = jnp.dtype(x.dtype).itemsize
    # dtype-aware sublane alignment: 8 (f32) / 16 (bf16) / 32 (int8/fp8)
    align_r = max(8, 32 // itemsize)

    a = log_scale.astype(jnp.float32)    # (NUM_FLOWS, C)
    b = shift.astype(jnp.float32)        # (NUM_FLOWS, C)

    # --- Pre-combine the flow chain into per-channel constants (tiny) ------
    #   z = x * exp(sum_k a_k) + eff_shift,   eff_shift composed iteratively.
    eff_ls = jnp.zeros((C,), jnp.float32)
    eff_sh = jnp.zeros((C,), jnp.float32)
    ld_per_ch = jnp.zeros((C,), jnp.float32)
    for k in range(NUM_FLOWS):
        eff_sh = eff_sh * jnp.exp(a[k]) + b[k]
        eff_ls = eff_ls + a[k]
        # per-flow nan_to_num BEFORE summing (matches the reference loop)
        ld_per_ch = ld_per_ch + jnp.nan_to_num(a[k], nan=0.0)
    eff_scale = jnp.exp(eff_ls)          # NaN in any a_k still propagates to z

    # Packed per-row (b, c) parameters; row index = b * C + c.
    params = jnp.stack([jnp.tile(eff_scale, B), jnp.tile(eff_sh, B)],
                       axis=1)           # (R, 2) f32

    # --- Lane/sublane-dense layout + tile selection -------------------------
    x2 = x.reshape(R, HW)

    # Lane axis first: prefer full rows -> one contiguous HBM transfer/block.
    if HW <= _MAX_FULL_ROW_LANES:
        tile_l = HW                      # full dim: always a legal block
    else:
        tile_l = _TILE_L_FALLBACK        # multiple of 128; ragged tail masked

    # Row axis: size the block toward ~_TARGET_BLOCK_BYTES.
    rows_target = max(align_r, _TARGET_BLOCK_BYTES // max(1, tile_l * itemsize))
    if R <= rows_target:
        tile_r = R                       # full dim: always legal
    else:
        tile_r = _round_down(rows_target, align_r)

    # v7x megacore: make sure both TensorCores get work (>=2 blocks on axis 0)
    if pl.cdiv(R, tile_r) == 1 and pl.cdiv(HW, tile_l) == 1 and R >= 2 * align_r:
        tile_r = _round_up(pl.cdiv(R, 2), align_r)

    # Grid ordering: keep j (lane axis) innermost so the (tile_r, 2) parameter
    # block keeps the same block index across all j steps (no re-DMA).
    grid = (pl.cdiv(R, tile_r), pl.cdiv(HW, tile_l))

    # VMEM budget: double-buffered x + z blocks + lane-padded param side-band.
    block_bytes = tile_r * tile_l * itemsize
    param_bytes = tile_r * 128 * 4
    vmem_need = 2 * 2 * block_bytes + 2 * param_bytes
    vmem_limit = int(min(48 << 20,
                         max(16 << 20, vmem_need + vmem_need // 4 + (2 << 20))))

    cost = pl.CostEstimate(
        flops=2 * R * HW,
        transcendentals=0,
        bytes_accessed=2 * R * HW * itemsize + params.size * 4,
    )

    z2 = pl.pallas_call(
        flow_affine_kernel,
        out_shape=jax.ShapeDtypeStruct((R, HW), x.dtype),
        grid=grid,
        in_specs=[
            pl.BlockSpec((tile_r, 2), lambda i, j: (i, 0)),        # packed params
            pl.BlockSpec((tile_r, tile_l), lambda i, j: (i, j)),   # x
        ],
        out_specs=pl.BlockSpec((tile_r, tile_l), lambda i, j: (i, j)),
        compiler_params=pltpu.CompilerParams(
            dimension_semantics=("parallel", "parallel"),
            vmem_limit_bytes=vmem_limit),
        cost_estimate=cost,
        input_output_aliases=({1: 0} if donate_x else {}),
    )(params, x2)

    z = z2.reshape(B, C, H, W)
    # log_det is x-independent for these flows: broadcast tiny per-channel
    # constants in XLA instead of streaming a full tensor through the kernel.
    log_det = jnp.broadcast_to(ld_per_ch[None, :, None, None], (B, C, H, W))
    return z, log_det


def flow_sequence_reference(x, log_scale, shift):
    """Pure-JAX reference mirroring the PyTorch FlowSequence.forward."""
    z = x.astype(jnp.float32)
    log_det_sum = jnp.zeros_like(z)
    for k in range(NUM_FLOWS):
        a = log_scale[k][None, :, None, None]
        b = shift[k][None, :, None, None]
        z = z * jnp.exp(a) + b
        ld = jnp.broadcast_to(a, z.shape)
        ld = jnp.where(jnp.isnan(ld), 0.0, ld)
        log_det_sum = log_det_sum + ld
    return z.astype(x.dtype), log_det_sum


if __name__ == "__main__":
    key = jax.random.PRNGKey(0)
    kx, ka, kb = jax.random.split(key, 3)

    B, C, H, W = 2, 4, 16, 16
    x = jax.random.normal(kx, (B, C, H, W), dtype=jnp.float32)
    # deterministic, small per-flow per-channel parameters
    log_scale = 0.1 * jax.random.normal(ka, (NUM_FLOWS, C), dtype=jnp.float32)
    shift = 0.1 * jax.random.normal(kb, (NUM_FLOWS, C), dtype=jnp.float32)

    z, log_det = flow_sequence_forward(x, log_scale, shift)
    jax.block_until_ready((z, log_det))

    z_ref, ld_ref = flow_sequence_reference(x, log_scale, shift)
    assert jnp.allclose(z, z_ref, atol=1e-5, rtol=1e-5)
    assert jnp.allclose(log_det, ld_ref, atol=1e-5, rtol=1e-5)

    print("KERNEL_OK")
</pallas_src>

<mosaic_0001>
module attributes {stable_mosaic.version = 11 : i64} {
  func.func @flow_affine_kernel(%arg0: i32, %arg1: i32, %arg2: memref<8x2xf32, #tpu.memory_space<vmem>>, %arg3: memref<8x256xf32, #tpu.memory_space<vmem>>, %arg4: memref<8x256xf32, #tpu.memory_space<vmem>>) attributes {dimension_semantics = [#tpu.dimension_semantics<parallel>, #tpu.dimension_semantics<parallel>], iteration_bounds = array<i64: 1, 1>, scalar_prefetch = 0 : i64, scratch_operands = 0 : i64, tpu.core_type = #tpu.core_type<tc>, window_params = [{transform_indices = @transform_0, window_bounds = array<i64: 8, 2>}, {transform_indices = @transform_1, window_bounds = array<i64: 8, 256>}, {transform_indices = @transform_2, window_bounds = array<i64: 8, 256>}]} {
    %c0 = arith.constant 0 : index
    %c0_0 = arith.constant 0 : index
    %0 = vector.load %arg2[%c0, %c0_0] : memref<8x2xf32, #tpu.memory_space<vmem>>, vector<8x2xf32>
    %1 = vector.extract_strided_slice %0 {offsets = [0, 0], sizes = [8, 1], strides = [1, 1]} : vector<8x2xf32> to vector<8x1xf32>
    %2 = vector.extract_strided_slice %0 {offsets = [0, 1], sizes = [8, 1], strides = [1, 1]} : vector<8x2xf32> to vector<8x1xf32>
    %c0_1 = arith.constant 0 : index
    %c0_2 = arith.constant 0 : index
    %3 = vector.load %arg3[%c0_1, %c0_2] : memref<8x256xf32, #tpu.memory_space<vmem>>, vector<8x256xf32>
    %4 = vector.broadcast %1 : vector<8x1xf32> to vector<8x256xf32>
    %5 = arith.mulf %3, %4 : vector<8x256xf32>
    %6 = vector.broadcast %2 : vector<8x1xf32> to vector<8x256xf32>
    %7 = arith.addf %5, %6 : vector<8x256xf32>
    %c0_3 = arith.constant 0 : index
    %c0_4 = arith.constant 0 : index
    %8 = vector.load %arg4[%c0_3, %c0_4] : memref<8x256xf32, #tpu.memory_space<vmem>>, vector<8x256xf32>
    tpu.vector_store %arg4[%c0_3, %c0_4], %7 {strides = array<i32>} : memref<8x256xf32, #tpu.memory_space<vmem>>, vector<8x256xf32>,
    return
  }
  func.func @transform_0(%arg0: i32, %arg1: i32) -> (i32, i32) {
    %c0_i32 = arith.constant 0 : i32
    %c0_i32_0 = arith.constant 0 : i32
    return %arg0, %c0_i32 : i32, i32
  }
  func.func @transform_1(%arg0: i32, %arg1: i32) -> (i32, i32) {
    %c0_i32 = arith.constant 0 : i32
    return %arg0, %arg1 : i32, i32
  }
  func.func @transform_2(%arg0: i32, %arg1: i32) -> (i32, i32) {
    %c0_i32 = arith.constant 0 : i32
    return %arg0, %arg1 : i32, i32
  }
}

</mosaic_0001>

<llo_original>
// kernel: tpu_custom_call.1
$region0: #{tpu_custom_call.1}
  #allocation0 [shape = 'u32[]', space=smem, size = 0x4, offset = 0x4, fixed_abs, tag = 'smem constant byte address 0x4 - core index']
  #allocation1 [shape = 'u32[72,128]{1,0:T(1,128)}', space=vmem, size = 0x9000, scoped, tag = 'internal scratch']
  %s0 = inlined_call_operand.vmem [shape: f32[8,2], index: 0, kind: input, shape index: {}]
  %s1 = inlined_call_operand.hbm [shape: f32[8,256], index: 1, kind: input, shape index: {}]
  %s2 = inlined_call_operand.hbm [shape: f32[8,256], index: 2, kind: output, shape index: {}]
  %s3 = sld [smem:[#allocation0]]
  $region22: #{tpu_custom_call.1} parent=0
    _
  %s5 = ssub.s32 1, %s3
  %s6 = scalar_select 0, %s5, %s3
  $region1: #{tpu_custom_call.1} parent=0
    #allocation2 [shape = 'u8[8192]{0}', space=vmem, size = 0x2000, scoped, tag = 'input window, operand 1, single buffered']
    #allocation3 [shape = 's32[1]{0}', space=sflag, size = 0x4, scoped, tag = 'scoped memory for tpu_custom_call.1']
    #allocation4 [shape = 's32[1]{0}', space=sflag, size = 0x4, scoped, tag = 'scoped memory for tpu_custom_call.1']
    #allocation5 [shape = 'u8[8192]{0}', space=vmem, size = 0x2000, scoped, tag = 'output window, operand 0, single buffered']
    %7 = vsyncpa [#allocation3], 0
    %8 = vsyncpa [#allocation4], 0
    // Predicated region
    $region2: #{tpu_custom_call.1} parent=1 // pred_check
      _
    $region3: #{tpu_custom_call.1} parent=1 // pred_check_branch
      %10 = sbr.rel (0) target = $region5
    $region4: #{tpu_custom_call.1} parent=1 // pred_region
      _
    $region5: #{tpu_custom_call.1} parent=1 // pred_fallthru
      _
    // Predicated region
    $region6: #{tpu_custom_call.1} parent=1 // pred_check
      _
    $region7: #{tpu_custom_call.1} parent=1 // pred_check_branch
      %12 = sbr.rel (0) target = $region9
    $region8: #{tpu_custom_call.1} parent=1 // pred_region
      %14 = vsyncadd [#allocation3], 0
      %s16 = sshll.u32 %s1, 4
      %s17 = int_to_ptr.hbm [resolvable:$true] %s16
      %s18 = sshll.u32 [#allocation2], 4
      %s19 = int_to_ptr.vmem [resolvable:$true] %s18
      %21 = dma.hbm_to_vmem [thread:$0]  %s17, 256, %s19, [#allocation3]
    $region9: #{tpu_custom_call.1} parent=1 // pred_fallthru
      _
    // Predicated region
    $region10: #{tpu_custom_call.1} parent=1 // pred_check
      _
    $region11: #{tpu_custom_call.1} parent=1 // pred_check_branch
      %23 = sbr.rel (0) target = $region13
    $region12: #{tpu_custom_call.1} parent=1 // pred_region
      %25 = dma.done [#allocation3], 256
    $region13: #{tpu_custom_call.1} parent=1 // pred_fallthru
      _
    %v26 = vld [vmem:[%s0] sm:$0xff]
    %v27 = vld [vmem:[#allocation2] sm:$0xff]
    %v28 = vld [vmem:[#allocation2 + $0x8] sm:$0xff]
    %30 = vset.pattern.permute.xlu0 0
    %31 = vperm.xlu0 %30, %v26
    %v32 = vpop.permute.xlu0 %31
    %v34 = vmul.f32 %v27, %v32
    %v35 = vmul.f32 %v28, %v32
    %36 = vset.pattern.permute.xlu0 1
    %37 = vperm.xlu0 %36, %v26
    %v38 = vpop.permute.xlu0 %37
    %v40 = vadd.f32 %v34, %v38
    %v41 = vadd.f32 %v35, %v38
    %42 = vst [vmem:[#allocation5] sm:$0xff] %v40
    %43 = vst [vmem:[#allocation5 + $0x8] sm:$0xff] %v41
    // Predicated region
    $region14: #{tpu_custom_call.1} parent=1 // pred_check
      _
    $region15: #{tpu_custom_call.1} parent=1 // pred_check_branch
      %45 = sbr.rel (0) target = $region17
    $region16: #{tpu_custom_call.1} parent=1 // pred_region
      %47 = vsyncadd [#allocation4], 0
      %s49 = sshll.u32 [#allocation5], 4
      %s50 = int_to_ptr.vmem [resolvable:$true] %s49
      %s51 = sshll.u32 %s2, 4
      %s52 = int_to_ptr.hbm [resolvable:$true] %s51
      %54 = dma.vmem_to_hbm [thread:$0]  %s50, 256, %s52, [#allocation4]
    $region17: #{tpu_custom_call.1} parent=1 // pred_fallthru
      _
    // Predicated region
    $region18: #{tpu_custom_call.1} parent=1 // pred_check
      _
    $region19: #{tpu_custom_call.1} parent=1 // pred_check_branch
      %56 = sbr.rel (0) target = $region21
    $region20: #{tpu_custom_call.1} parent=1 // pred_region
      %58 = dma.done [#allocation4], 256
    $region21: #{tpu_custom_call.1} parent=1 // pred_fallthru
      _
    %59 = vsyncpa [#allocation3], 1
    %60 = vsyncpa [#allocation4], 1

</llo_original>
